<compile_context>
chip_gen: v6e
topology: v6e:2x2x1
jax: 0.10.0
libtpu: 0.0.40
codegen_flags: <defaults>
</compile_context>

<pallas_src>
import functools

import jax
import jax.numpy as jnp
from jax import lax
from jax.experimental import pallas as pl
from jax.experimental.pallas import tpu as pltpu

_NEG_BIG = -1.0e30  # pad value for vocab lanes; exp(pad - max) underflows to 0


def _round_up(x, m):
    return ((x + m - 1) // m) * m


def pad_embedding_table(emb_table):
    """Pad a (V, C) float table to (round_up(V, 8), round_up(C, 128)) float32,
    with -1e30 in the padding.  Call once at model init and reuse the result."""
    v, c = emb_table.shape
    vr, vpad = _round_up(v, 8), _round_up(c, 128)
    emb_table = emb_table.astype(jnp.float32)
    if (vr, vpad) == (v, c):
        return emb_table
    out = jnp.full((vr, vpad), _NEG_BIG, dtype=jnp.float32)
    return out.at[:v, :c].set(emb_table)


def _bigram_kernel(compute_loss, write_logits, prefetch_next, *refs):
    """One grid step: gather `tn` embedding rows (DMA, indices from SMEM),
    optionally write them out as logits, optionally emit per-row cross entropy."""
    it = iter(refs)
    idx_smem = next(it)                                # (n_pad,) token ids in SMEM
    tgt_ref = next(it) if compute_loss else None       # (tn, 1) targets
    emb_ref = next(it)                                 # table: VMEM-resident or HBM
    logits_ref = next(it) if write_logits else None    # (tn, vpad)
    loss_ref = next(it) if compute_loss else None      # (tn, 1)
    gather_ref = next(it)                              # (slots, tn, vpad) VMEM
    sems = next(it)                                    # (slots,) DMA semaphores

    i = pl.program_id(0)
    nb = pl.num_programs(0)
    _, tn, vpad = gather_ref.shape

    def issue_gather(tile, slot):
        # table[idx[tile*tn + r], :] -> gather_ref[slot, r, :]  for r in [0, tn)
        base = tile * tn

        @pl.loop(0, tn)
        def _(r):
            row = idx_smem[base + r]
            pltpu.make_async_copy(
                emb_ref.at[pl.ds(row, 1)],
                gather_ref.at[slot, pl.ds(r, 1)],
                sems.at[slot],
            ).start()

    def wait_gather(slot):
        # All row copies of a slot share one semaphore; wait once per issued copy.
        @pl.loop(0, tn)
        def _(r):
            pltpu.make_async_copy(
                emb_ref.at[pl.ds(0, 1)],
                gather_ref.at[slot, pl.ds(0, 1)],
                sems.at[slot],
            ).wait()

    if prefetch_next:
        # HBM table: double-buffer the gather across grid steps so tile i+1's
        # row DMAs overlap tile i's compute / logits writeback.
        slot = i & 1

        @pl.when(i == 0)
        def _():
            issue_gather(0, 0)                          # prime the pipeline

        @pl.when(i + 1 < nb)
        def _():
            issue_gather(i + 1, 1 - slot)               # prefetch next tile

        wait_gather(slot)
    else:
        # VMEM-resident table: local row copies are cheap; keep every grid step
        # independent so the token axis can be megacore-"parallel".
        slot = 0
        issue_gather(i, 0)
        wait_gather(0)

    rows = gather_ref[slot]                             # (tn, vpad) float32

    if write_logits:
        logits_ref[...] = rows                          # lane-dense 128-mult stores

    if compute_loss:
        # Per-row CE: logsumexp(row) - row[target].  Padded vocab lanes hold
        # -1e30, so exp(pad - max) underflows to exactly 0.
        m = jnp.max(rows, axis=-1, keepdims=True)
        lse = jnp.log(jnp.sum(jnp.exp(rows - m), axis=-1, keepdims=True)) + m
        lane = lax.broadcasted_iota(jnp.int32, (tn, vpad), 1)
        tgt_logit = jnp.sum(jnp.where(lane == tgt_ref[...], rows, 0.0),
                            axis=-1, keepdims=True)
        loss_ref[...] = lse - tgt_logit                 # reduced to a mean outside


def _auto_block_rows(n_tokens, vpad, write_logits, use_vmem_table, table_bytes,
                     vmem_limit_bytes):
    """Largest multiple-of-8 token tile (<= 256) that fits the VMEM budget."""
    budget = int(vmem_limit_bytes * 0.75)
    if use_vmem_table:
        budget -= table_bytes
    slots = 1 if use_vmem_table else 2
    bytes_per_row = 4 * vpad * slots                    # gather scratch
    if write_logits:
        bytes_per_row += 2 * 4 * vpad                   # double-buffered logits block
    bytes_per_row += 32                                 # targets / per-row loss
    tn = budget // max(bytes_per_row, 1)
    tn = min(tn, 256, _round_up(max(n_tokens, 1), 8))
    return int(max(8, (tn // 8) * 8))


def bigram_forward(idx, targets, emb_padded, vocab_size, *, return_logits=True,
                   block_rows=None, vmem_table_limit_bytes=16 * 1024 * 1024,
                   vmem_limit_bytes=48 * 1024 * 1024):
    """Forward pass of the bigram LM.

    idx, targets: (B, T) int (targets may be None); emb_padded: result of
    pad_embedding_table(); vocab_size: V.
      * targets given : returns (logits (B*T, V), loss scalar)  [torch .view semantics]
      * targets None  : returns (logits (B, T, V), None)
      * return_logits=False (requires targets): returns (None, loss) and skips the
        full-logits HBM writeback entirely.
    vmem_limit_bytes defaults to 48 MiB (safe on v7x's 64 MiB VMEM); raise to
    ~96 MiB on v5e/v6e for bigger tiles at large vocabularies.
    """
    B, T = idx.shape
    V = int(vocab_size)
    vr, vpad = emb_padded.shape
    N = B * T

    compute_loss = targets is not None
    write_logits = bool(return_logits)
    if not (compute_loss or write_logits):
        raise ValueError("targets is None and return_logits=False: nothing to do")

    table_bytes = vr * vpad * 4
    use_vmem_table = table_bytes <= vmem_table_limit_bytes

    if block_rows is None:
        block_rows = _auto_block_rows(N, vpad, write_logits, use_vmem_table,
                                      table_bytes, vmem_limit_bytes)
    assert block_rows % 8 == 0 and block_rows > 0
    tn = block_rows
    nb = pl.cdiv(N, tn)
    n_pad = nb * tn

    # Clamp ids so a bad token can never drive an out-of-bounds row DMA.
    idx_flat = jnp.clip(idx.reshape(N).astype(jnp.int32), 0, V - 1)
    idx_flat = jnp.zeros((n_pad,), jnp.int32).at[:N].set(idx_flat)

    args = [idx_flat]
    in_specs = []
    if compute_loss:
        tgt_flat = jnp.clip(targets.reshape(N).astype(jnp.int32), 0, V - 1)
        tgt_col = jnp.zeros((n_pad, 1), jnp.int32).at[:N, 0].set(tgt_flat)
        args.append(tgt_col)
        in_specs.append(pl.BlockSpec((tn, 1), lambda i, idx_ref: (i, 0)))

    if use_vmem_table:
        # Small vocab: whole padded table resident in VMEM for the entire call.
        in_specs.append(pl.BlockSpec(memory_space=pltpu.MemorySpace.VMEM))
    else:
        # Large vocab: table stays in HBM; rows are DMA'd on demand.
        in_specs.append(pl.BlockSpec(memory_space=pl.ANY))
    args.append(emb_padded)

    out_shapes, out_specs = [], []
    if write_logits:
        out_shapes.append(jax.ShapeDtypeStruct((n_pad, vpad), jnp.float32))
        out_specs.append(pl.BlockSpec((tn, vpad), lambda i, idx_ref: (i, 0)))
    if compute_loss:
        out_shapes.append(jax.ShapeDtypeStruct((n_pad, 1), jnp.float32))
        out_specs.append(pl.BlockSpec((tn, 1), lambda i, idx_ref: (i, 0)))

    prefetch_next = not use_vmem_table
    slots = 2 if prefetch_next else 1
    kernel = functools.partial(_bigram_kernel, compute_loss, write_logits,
                               prefetch_next)

    outs = pl.pallas_call(
        kernel,
        out_shape=tuple(out_shapes),
        grid_spec=pltpu.PrefetchScalarGridSpec(
            num_scalar_prefetch=1,          # idx -> SMEM, drives the row gather
            grid=(nb,),
            in_specs=in_specs,
            out_specs=out_specs,
            scratch_shapes=[
                pltpu.VMEM((slots, tn, vpad), jnp.float32),  # gathered rows
                pltpu.SemaphoreType.DMA((slots,)),           # one shared sem / slot
            ],
        ),
        compiler_params=pltpu.CompilerParams(
            # Cross-step manual prefetch (HBM path) needs sequential order; the
            # VMEM-table path has no cross-step state -> megacore "parallel".
            dimension_semantics=("arbitrary",) if prefetch_next else ("parallel",),
            vmem_limit_bytes=vmem_limit_bytes,
        ),
    )(*args)

    if not isinstance(outs, (tuple, list)):
        outs = (outs,)
    outs = list(outs)

    logits = None
    if write_logits:
        logits_pad = outs.pop(0)
        logits = logits_pad[:N, :V]
        if not compute_loss:
            # Match torch: (B, T, C) when targets is None, (B*T, C) otherwise.
            logits = logits.reshape(B, T, V)

    loss = None
    if compute_loss:
        per_row = outs.pop(0)
        loss = jnp.mean(per_row[:N, 0])

    return logits, loss


if __name__ == "__main__":
    B, T = 2, 8
    alpha_size = 32  # vocabulary size (V)

    key = jax.random.PRNGKey(0)
    k_emb, k_idx, k_tgt = jax.random.split(key, 3)

    # nn.Embedding default init: N(0, 1)
    emb_table = jax.random.normal(k_emb, (alpha_size, alpha_size), dtype=jnp.float32)
    idx = jax.random.randint(k_idx, (B, T), 0, alpha_size, dtype=jnp.int32)
    targets = jax.random.randint(k_tgt, (B, T), 0, alpha_size, dtype=jnp.int32)

    # Pad the table once (model init); every forward call below reuses it.
    emb_padded = pad_embedding_table(emb_table)

    # Pure-JAX reference (embedding gather + cross entropy).
    logits_ref3 = emb_table[idx]                               # (B, T, V)
    lf = logits_ref3.reshape(B * T, alpha_size)
    tf = targets.reshape(B * T)
    lse = jax.scipy.special.logsumexp(lf, axis=-1)
    loss_ref = jnp.mean(lse - lf[jnp.arange(B * T), tf])

    # 1) Training-style call (small vocab -> VMEM-resident table, "parallel" grid).
    logits, loss = bigram_forward(idx, targets, emb_padded, alpha_size)
    jax.block_until_ready((logits, loss))
    assert logits.shape == (B * T, alpha_size)
    assert jnp.allclose(logits, lf, atol=1e-5, rtol=1e-5)
    assert jnp.allclose(loss, loss_ref, atol=1e-5, rtol=1e-5)

    # 2) Loss-only mode: skips the full-logits HBM writeback.
    no_logits, loss2 = bigram_forward(idx, targets, emb_padded, alpha_size,
                                      return_logits=False)
    jax.block_until_ready(loss2)
    assert no_logits is None
    assert jnp.allclose(loss2, loss_ref, atol=1e-5, rtol=1e-5)

    # 3) Inference-style call (targets=None): logits only, no cross-entropy math.
    logits3, loss3 = bigram_forward(idx, None, emb_padded, alpha_size)
    jax.block_until_ready(logits3)
    assert loss3 is None
    assert jnp.allclose(logits3, logits_ref3, atol=1e-5, rtol=1e-5)

    # 4) Force the large-vocab path (HBM table + double-buffered DMA row gather)
    #    with 2 grid steps so the cross-step prefetch is exercised.
    logits4, loss4 = bigram_forward(idx, targets, emb_padded, alpha_size,
                                    block_rows=8, vmem_table_limit_bytes=0)
    jax.block_until_ready((logits4, loss4))
    assert jnp.allclose(logits4, lf, atol=1e-5, rtol=1e-5)
    assert jnp.allclose(loss4, loss_ref, atol=1e-5, rtol=1e-5)

    print("KERNEL_OK")
</pallas_src>

<mosaic_0001>
module attributes {stable_mosaic.version = 11 : i64} {
  func.func @_bigram_kernel(%arg0: i32, %arg1: memref<16xi32, #tpu.memory_space<smem>>, %arg2: memref<16x1xi32, #tpu.memory_space<vmem>>, %arg3: memref<32x128xf32, #tpu.memory_space<vmem>>, %arg4: memref<16x128xf32, #tpu.memory_space<vmem>>, %arg5: memref<16x1xf32, #tpu.memory_space<vmem>>, %arg6: memref<1x16x128xf32, #tpu.memory_space<vmem>>, %arg7: memref<1x!tpu.dma_semaphore, #tpu.memory_space<semaphore_mem>>) attributes {dimension_semantics = [#tpu.dimension_semantics<parallel>], iteration_bounds = array<i64: 1>, scalar_prefetch = 1 : i64, scratch_operands = 2 : i64, tpu.core_type = #tpu.core_type<tc>, window_params = [{transform_indices = @transform_0, window_bounds = array<i64: 16, 1>}, {pipeline_mode = #tpu.pipeline_mode<synchronous>, transform_indices = @transform_1, window_bounds = array<i64: 32, 128>}, {transform_indices = @transform_2, window_bounds = array<i64: 16, 128>}, {transform_indices = @transform_3, window_bounds = array<i64: 16, 1>}]} {
    %c16_i32 = arith.constant 16 : i32
    %0 = arith.muli %arg0, %c16_i32 : i32
    %c0_i32 = arith.constant 0 : i32
    %c16_i32_0 = arith.constant 16 : i32
    %1 = arith.addi %c0_i32, %c16_i32_0 : i32
    %c1_i32 = arith.constant 1 : i32
    scf.for %arg8 = %c0_i32 to %1 step %c1_i32  : i32 {
      %c1_i32_16 = arith.constant 1 : i32
      %25 = arith.muli %arg8, %c1_i32_16 : i32
      %c0_i32_17 = arith.constant 0 : i32
      %26 = arith.addi %c0_i32_17, %25 : i32
      %27 = arith.addi %0, %26 : i32
      %28 = arith.index_cast %27 : i32 to index
      %29 = memref.load %arg1[%28] : memref<16xi32, #tpu.memory_space<smem>>
      %c0_i32_18 = arith.constant 0 : i32
      %c0_i32_19 = arith.constant 0 : i32
      %c0_i32_20 = arith.constant 0 : i32
      %30 = tpu.memref_slice %arg3[%29, %c0_i32_20] : memref<32x128xf32, #tpu.memory_space<vmem>> -> memref<1x128xf32, #tpu.memory_space<vmem>>
      %c0_i32_21 = arith.constant 0 : i32
      %31 = tpu.memref_slice %arg6[%c0_i32_18, %26, %c0_i32_21] : memref<1x16x128xf32, #tpu.memory_space<vmem>> -> memref<1x1x128xf32, #tpu.memory_space<vmem>>
      %32 = tpu.memref_squeeze %31 : memref<1x1x128xf32, #tpu.memory_space<vmem>> -> memref<1x128xf32, #tpu.memory_space<vmem>>
      %33 = tpu.memref_slice %arg7[%c0_i32_19] : memref<1x!tpu.dma_semaphore, #tpu.memory_space<semaphore_mem>> -> memref<1x!tpu.dma_semaphore, #tpu.memory_space<semaphore_mem>>
      %34 = tpu.memref_squeeze %33 : memref<1x!tpu.dma_semaphore, #tpu.memory_space<semaphore_mem>> -> memref<!tpu.dma_semaphore, #tpu.memory_space<semaphore_mem>>
      tpu.enqueue_dma source(%30 : memref<1x128xf32, #tpu.memory_space<vmem>>) target(%32 : memref<1x128xf32, #tpu.memory_space<vmem>>) target_semaphore(%34 : memref<!tpu.dma_semaphore, #tpu.memory_space<semaphore_mem>>)
    }
    %c16_i32_1 = arith.constant 16 : i32
    %c0_i32_2 = arith.constant 0 : i32
    %c16_i32_3 = arith.constant 16 : i32
    %2 = arith.addi %c0_i32_2, %c16_i32_3 : i32
    %c1_i32_4 = arith.constant 1 : i32
    scf.for %arg8 = %c0_i32_2 to %2 step %c1_i32_4  : i32 {
      %c0_i32_16 = arith.constant 0 : i32
      %c0_i32_17 = arith.constant 0 : i32
      %c0_i32_18 = arith.constant 0 : i32
      %c0_i32_19 = arith.constant 0 : i32
      %25 = tpu.memref_slice %arg3[%c0_i32_18, %c0_i32_19] : memref<32x128xf32, #tpu.memory_space<vmem>> -> memref<1x128xf32, #tpu.memory_space<vmem>>
      %c0_i32_20 = arith.constant 0 : i32
      %c0_i32_21 = arith.constant 0 : i32
      %26 = tpu.memref_slice %arg6[%c0_i32_16, %c0_i32_20, %c0_i32_21] : memref<1x16x128xf32, #tpu.memory_space<vmem>> -> memref<1x1x128xf32, #tpu.memory_space<vmem>>
      %27 = tpu.memref_squeeze %26 : memref<1x1x128xf32, #tpu.memory_space<vmem>> -> memref<1x128xf32, #tpu.memory_space<vmem>>
      %28 = tpu.memref_slice %arg7[%c0_i32_17] : memref<1x!tpu.dma_semaphore, #tpu.memory_space<semaphore_mem>> -> memref<1x!tpu.dma_semaphore, #tpu.memory_space<semaphore_mem>>
      %29 = tpu.memref_squeeze %28 : memref<1x!tpu.dma_semaphore, #tpu.memory_space<semaphore_mem>> -> memref<!tpu.dma_semaphore, #tpu.memory_space<semaphore_mem>>
      tpu.wait_dma2 semaphore(%29 : memref<!tpu.dma_semaphore, #tpu.memory_space<semaphore_mem>>) src(%25 : memref<1x128xf32, #tpu.memory_space<vmem>>) dst(%27 : memref<1x128xf32, #tpu.memory_space<vmem>>)
    }
    %c0 = arith.constant 0 : index
    %c0_5 = arith.constant 0 : index
    %c0_6 = arith.constant 0 : index
    %3 = vector.load %arg6[%c0, %c0_5, %c0_6] : memref<1x16x128xf32, #tpu.memory_space<vmem>>, vector<1x16x128xf32>
    %4 = vector.shape_cast %3 : vector<1x16x128xf32> to vector<16x128xf32>
    %c0_7 = arith.constant 0 : index
    %c0_8 = arith.constant 0 : index
    %5 = vector.load %arg4[%c0_7, %c0_8] : memref<16x128xf32, #tpu.memory_space<vmem>>, vector<16x128xf32>
    tpu.vector_store %arg4[%c0_7, %c0_8], %4 {strides = array<i32>} : memref<16x128xf32, #tpu.memory_space<vmem>>, vector<16x128xf32>,
    %cst = arith.constant dense<0xFF800000> : vector<16xf32>
    %6 = vector.multi_reduction <maximumf>, %4, %cst [1] : vector<16x128xf32> to vector<16xf32>
    %7 = vector.shape_cast %6 : vector<16xf32> to vector<16x1xf32>
    %8 = vector.broadcast %7 : vector<16x1xf32> to vector<16x128xf32>
    %9 = arith.subf %4, %8 : vector<16x128xf32>
    %10 = math.exp %9 : vector<16x128xf32>
    %cst_9 = arith.constant dense<0.000000e+00> : vector<16xf32>
    %11 = vector.multi_reduction <add>, %10, %cst_9 [1] : vector<16x128xf32> to vector<16xf32>
    %12 = vector.shape_cast %11 : vector<16xf32> to vector<16x1xf32>
    %13 = math.log %12 : vector<16x1xf32>
    %14 = arith.addf %13, %7 : vector<16x1xf32>
    %15 = tpu.iota {dimensions = array<i32: 1>} : vector<16x128xi32>
    %c0_10 = arith.constant 0 : index
    %c0_11 = arith.constant 0 : index
    %16 = vector.load %arg2[%c0_10, %c0_11] : memref<16x1xi32, #tpu.memory_space<vmem>>, vector<16x1xi32>
    %17 = vector.broadcast %16 : vector<16x1xi32> to vector<16x128xi32>
    %18 = arith.cmpi eq, %15, %17 : vector<16x128xi32>
    %cst_12 = arith.constant 0.000000e+00 : f32
    %19 = vector.broadcast %cst_12 : f32 to vector<16x128xf32>
    %20 = arith.select %18, %4, %19 : vector<16x128xi1>, vector<16x128xf32>
    %cst_13 = arith.constant dense<0.000000e+00> : vector<16xf32>
    %21 = vector.multi_reduction <add>, %20, %cst_13 [1] : vector<16x128xf32> to vector<16xf32>
    %22 = vector.shape_cast %21 : vector<16xf32> to vector<16x1xf32>
    %23 = arith.subf %14, %22 : vector<16x1xf32>
    %c0_14 = arith.constant 0 : index
    %c0_15 = arith.constant 0 : index
    %24 = vector.load %arg5[%c0_14, %c0_15] : memref<16x1xf32, #tpu.memory_space<vmem>>, vector<16x1xf32>
    tpu.vector_store %arg5[%c0_14, %c0_15], %23 {strides = array<i32>} : memref<16x1xf32, #tpu.memory_space<vmem>>, vector<16x1xf32>,
    return
  }
  func.func @transform_0(%arg0: i32, %arg1: memref<16xi32, #tpu.memory_space<smem>>) -> (i32, i32) {
    %c0_i32 = arith.constant 0 : i32
    %c0_i32_0 = arith.constant 0 : i32
    return %arg0, %c0_i32 : i32, i32
  }
  func.func @transform_1(%arg0: i32, %arg1: memref<16xi32, #tpu.memory_space<smem>>) -> (i32, i32) {
    %c0_i32 = arith.constant 0 : i32
    %c0_i32_0 = arith.constant 0 : i32
    %c0_i32_1 = arith.constant 0 : i32
    return %c0_i32, %c0_i32_0 : i32, i32
  }
  func.func @transform_2(%arg0: i32, %arg1: memref<16xi32, #tpu.memory_space<smem>>) -> (i32, i32) {
    %c0_i32 = arith.constant 0 : i32
    %c0_i32_0 = arith.constant 0 : i32
    return %arg0, %c0_i32 : i32, i32
  }
  func.func @transform_3(%arg0: i32, %arg1: memref<16xi32, #tpu.memory_space<smem>>) -> (i32, i32) {
    %c0_i32 = arith.constant 0 : i32
    %c0_i32_0 = arith.constant 0 : i32
    return %arg0, %c0_i32 : i32, i32
  }
}

</mosaic_0001>

<llo_original>
// kernel: tpu_custom_call.1
$region0: #{tpu_custom_call.1}
  #allocation0 [shape = 'u32[]', space=smem, size = 0x4, offset = 0x4, fixed_abs, tag = 'smem constant byte address 0x4 - core index']
  #allocation1 [shape = 'u32[144,128]{1,0:T(1,128)}', space=vmem, size = 0x12000, scoped, tag = 'internal scratch']
  #allocation2 [shape = 'f32[1,16,128]{2,1,0:T(8,128)}', space=vmem, size = 0x2000, scoped, tag = 'scratch operand']
  #allocation3 [shape = 's32[1]{0}', space=sflag, size = 0x4, scoped, tag = 'scratch operand']
  #allocation4 [shape = 's32[1]{0}', space=sflag, size = 0x4, scoped, tag = 'scoped memory for tpu_custom_call.1']
  #allocation5 [shape = 'u8[512]{0}', space=smem, size = 0x200, scoped, tag = 'prefetched SMEM operand 0']
  #allocation10 [shape = 's32[]', space=sflag, size = 0x4, offset = 0, fixed_abs, tag = 'sflag constant byte address 0x0 - dummy sync flag']
  %s0 = inlined_call_operand.vmem [shape: s32[16], index: 0, kind: input, shape index: {}]
  %s1 = inlined_call_operand.vmem [shape: s32[16,1], index: 1, kind: input, shape index: {}]
  %s2 = inlined_call_operand.hbm [shape: f32[32,128], index: 2, kind: input, shape index: {}]
  %s3 = inlined_call_operand.hbm [shape: f32[16,128], index: 3, kind: output, shape index: {0}]
  %s4 = inlined_call_operand.vmem [shape: f32[16,1], index: 4, kind: output, shape index: {1}]
  %5 = xla_tuple %s3, %s4
  %s6 = sld [smem:[#allocation0]]
  $region74: #{tpu_custom_call.1} parent=0
    _
  %s8 = ssub.s32 1, %s6
  %s9 = scalar_select 0, %s8, %s6
  %s10 = sshll.u32 %s0, 4
  %s11 = int_to_ptr.vmem [resolvable:$true] %s10
  %13 = dma.vmem_to_smem %s11, 16, [#allocation5], [#allocation4]
  %14 = dma.done [#allocation4], 16
  %15 = sfence
  $region1: #{tpu_custom_call.1} parent=0
    #allocation6 [shape = 'u8[16384]{0}', space=vmem, size = 0x4000, scoped, tag = 'input window, operand 2, single buffered']
    #allocation7 [shape = 's32[1]{0}', space=sflag, size = 0x4, scoped, tag = 'scoped memory for tpu_custom_call.1']
    #allocation8 [shape = 's32[1]{0}', space=sflag, size = 0x4, scoped, tag = 'scoped memory for tpu_custom_call.1']
    #allocation9 [shape = 'u8[8192]{0}', space=vmem, size = 0x2000, scoped, tag = 'output window, operand 0, single buffered']
    %16 = vsyncpa [#allocation7], 0
    %17 = vsyncpa [#allocation8], 0
    // Predicated region
    $region2: #{tpu_custom_call.1} parent=1 // pred_check
      _
    $region3: #{tpu_custom_call.1} parent=1 // pred_check_branch
      %19 = sbr.rel (0) target = $region5
    $region4: #{tpu_custom_call.1} parent=1 // pred_region
      _
    $region5: #{tpu_custom_call.1} parent=1 // pred_fallthru
      _
    // Predicated region
    $region6: #{tpu_custom_call.1} parent=1 // pred_check
      _
    $region7: #{tpu_custom_call.1} parent=1 // pred_check_branch
      %21 = sbr.rel (0) target = $region9
    $region8: #{tpu_custom_call.1} parent=1 // pred_region
      %s23 = ssub.s32 512, 512
      %24 = vsyncadd [#allocation7], %s23
      %s25 = sshll.u32 [#allocation6], 4
      %s26 = int_to_ptr.vmem [resolvable:$true] %s25
      %31 = dma.hbm_to_vmem [thread:$0]  %s2, 512, %s26, [#allocation7], 128, 128, 8
    $region9: #{tpu_custom_call.1} parent=1 // pred_fallthru
      _
    // Predicated region
    $region10: #{tpu_custom_call.1} parent=1 // pred_check
      _
    $region11: #{tpu_custom_call.1} parent=1 // pred_check_branch
      %33 = sbr.rel (0) target = $region13
    $region12: #{tpu_custom_call.1} parent=1 // pred_region
      %34 = dma.done [#allocation7], 512
    $region13: #{tpu_custom_call.1} parent=1 // pred_fallthru
      _
    %s35 = smul.u32 0, 16
    loop: start=0, step=1, limit=16
    $region14: #{tpu_custom_call.1} parent=1 // loop_pre_header
      _
    $region15: #{tpu_custom_call.1} parent=1 // loop_header
      %s37 = sphi 0, %s41
      %p38 = scmp.ge.s32.totalorder %s37, 16
    $region16: #{tpu_custom_call.1} parent=1 // loop_header_branch
      %40 = sbr.rel (%p38) target = $region20
    $region17: #{tpu_custom_call.1} parent=1 // loop_body
      %s42 = sadd.s32 %s35, %s37
      %s43 = sld [smem:[#allocation5 + %s42]]
      %s44 = scalar_lea.vmem [#allocation6], %s43
      %s45 = scalar_lea.vmem [#allocation2], %s37
      %p47 = scmp.lt.u32.totalorder 1, 8
      %p48 = pneg %p47
      // Predicated region
      $region21: #{tpu_custom_call.1} parent=17 // pred_check
        _
      $region22: #{tpu_custom_call.1} parent=17 // pred_check_branch
        %50 = sbr.rel (%p47) target = $region24
      $region23: #{tpu_custom_call.1} parent=17 // pred_region
        %s66 = sand.u32 1, 7
        %p67 = scmp.eq.s32.totalorder %s66, 0
        %p68 = pneg %p67
        // Predicated region
        $region36: #{tpu_custom_call.1} parent=23 // pred_check
          _
        $region37: #{tpu_custom_call.1} parent=23 // pred_check_branch
          %70 = sbr.rel (%p67) target = $region39
        $region38: #{tpu_custom_call.1} parent=23 // pred_region
          %s71 = sand.u32 1, 7
          %s72 = ssub.s32 1, %s71
          %s73 = scalar_lea.vmem %s44, %s72 [#allocation6]
          %s74 = ssub.s32 1, %s71
          %s75 = scalar_lea.vmem %s45, %s74 [#allocation2]
          %s76 = sshll.u32 1, %s71
          %s77 = ssub.s32 %s76, 1
          loop: start=0, step=1, limit=1
          $region40: #{tpu_custom_call.1} parent=38 // loop_pre_header
            _
          $region41: #{tpu_custom_call.1} parent=38 // loop_header
            %s79 = sphi 0, %s83
            %p80 = scmp.ge.s32.totalorder %s79, 1
            %s84 = sphi %s73, %s73
            %s85 = sphi %s75, %s75
          $region42: #{tpu_custom_call.1} parent=38 // loop_header_branch
            %82 = sbr.rel (%p80) target = $region46
          $region43: #{tpu_custom_call.1} parent=38 // loop_body
            %v86 = vld [vmem:[%s84] sm:%s77]
            %87 = vst [vmem:[%s85] sm:%s77] %v86
          $region44: #{tpu_custom_call.1} parent=38 // loop_footer
            %s83 = sadd.s32 1, %s79
          $region45: #{tpu_custom_call.1} parent=38 // loop_footer_branch
            %78 = sbr.rel target = $region41
          $region46: #{tpu_custom_call.1} parent=38 // loop_exit
            _
        $region39: #{tpu_custom_call.1} parent=23 // pred_fallthru
          _
      $region24: #{tpu_custom_call.1} parent=17 // pred_fallthru
        _
      // Predicated region
      $region25: #{tpu_custom_call.1} parent=17 // pred_check
        %p51 = pneg %p47
      $region26: #{tpu_custom_call.1} parent=17 // pred_check_branch
        %53 = sbr.rel (%p51) target = $region28
      $region27: #{tpu_custom_call.1} parent=17 // pred_region
        %s54 = sshll.u32 1, 1
        %s55 = ssub.s32 %s54, 1
        loop: start=0, step=1, limit=1
        $region29: #{tpu_custom_call.1} parent=27 // loop_pre_header
          _
        $region30: #{tpu_custom_call.1} parent=27 // loop_header
          %s57 = sphi 0, %s61
          %p58 = scmp.ge.s32.totalorder %s57, 1
          %s62 = sphi %s44, %s44
          %s63 = sphi %s45, %s45
        $region31: #{tpu_custom_call.1} parent=27 // loop_header_branch
          %60 = sbr.rel (%p58) target = $region35
        $region32: #{tpu_custom_call.1} parent=27 // loop_body
          %v64 = vld [vmem:[%s62] sm:%s55]
          %65 = vst [vmem:[%s63] sm:%s55] %v64
        $region33: #{tpu_custom_call.1} parent=27 // loop_footer
          %s61 = sadd.s32 1, %s57
        $region34: #{tpu_custom_call.1} parent=27 // loop_footer_branch
          %56 = sbr.rel target = $region30
        $region35: #{tpu_custom_call.1} parent=27 // loop_exit
          _
      $region28: #{tpu_custom_call.1} parent=17 // pred_fallthru
        _
      // Predicated region
      $region47: #{tpu_custom_call.1} parent=17 // pred_check
        _
      $region48: #{tpu_custom_call.1} parent=17 // pred_check_branch
        %90 = sbr.rel (0) target = $region50
      $region49: #{tpu_custom_call.1} parent=17 // pred_region
        %91 = vsyncadd [#allocation3], 16
      $region50: #{tpu_custom_call.1} parent=17 // pred_fallthru
        _
    $region18: #{tpu_custom_call.1} parent=1 // loop_footer
      %s41 = sadd.s32 1, %s37
    $region19: #{tpu_custom_call.1} parent=1 // loop_footer_branch
      %36 = sbr.rel target = $region15
    $region20: #{tpu_custom_call.1} parent=1 // loop_exit
      _
    loop: start=0, step=1, limit=16
    $region51: #{tpu_custom_call.1} parent=1 // loop_pre_header
      _
    $region52: #{tpu_custom_call.1} parent=1 // loop_header
      %s93 = sphi 0, %s97
      %p94 = scmp.ge.s32.totalorder %s93, 16
    $region53: #{tpu_custom_call.1} parent=1 // loop_header_branch
      %96 = sbr.rel (%p94) target = $region57
    $region54: #{tpu_custom_call.1} parent=1 // loop_body
      %s98 = smul.u32 1, 1
      %s99 = sshll.u32 %s98, 4
      %100 = dma.done [#allocation3], %s99
    $region55: #{tpu_custom_call.1} parent=1 // loop_footer
      %s97 = sadd.s32 1, %s93
    $region56: #{tpu_custom_call.1} parent=1 // loop_footer_branch
      %92 = sbr.rel target = $region52
    $region57: #{tpu_custom_call.1} parent=1 // loop_exit
      _
    %v101 = vld [vmem:[#allocation2] sm:$0xff]
    %v102 = vld [vmem:[#allocation2 + $0x8] sm:$0xff]
    %103 = vst [vmem:[#allocation9] sm:$0xff] %v101
    %104 = vst [vmem:[#allocation9 + $0x8] sm:$0xff] %v102
    %105 = vmax.xlane.f32.xlu0 %v101
    %v106 = vpop.xlane.xlu0 %105
    %107 = vmax.xlane.f32.xlu0 %v102
    %v108 = vpop.xlane.xlu0 %107
    %v109 = vsub.f32 %v101, %v106
    %v110 = vsub.f32 %v102, %v108
    %v111 = vmul.f32 %v109, 1.442695
    %v112 = vpow.pop %v111
    %v113 = vmul.f32 %v110, 1.442695
    %v114 = vpow.pop %v113
    %115 = vadd.xlane.f32.xlu0 %v112
    %v116 = vpop.xlane.xlu0 %115
    %117 = vadd.xlane.f32.xlu0 %v114
    %v118 = vpop.xlane.xlu0 %117
    %v119 = vlog2.pop %v116
    %v120 = vmul.f32 %v119, 0.6931472
    %v121 = vlog2.pop %v118
    %v122 = vmul.f32 %v121, 0.6931472
    %v123 = vadd.f32 %v120, %v106
    %v124 = vadd.f32 %v122, %v108
    %v125 = vlaneseq
    %v126 = vand.u32 %v125, 127
    %v127 = vld [vmem:[%s1] sm:$0xff]
    %v128 = vld [vmem:[%s1 + $0x8] sm:$0xff]
    %129 = vset.pattern.permute.xlu0 0
    %130 = vperm.xlu0 %129, %v127
    %v131 = vpop.permute.xlu0 %130
    %132 = vset.pattern.permute.xlu0 0
    %133 = vperm.xlu0 %132, %v128
    %v134 = vpop.permute.xlu0 %133
    %vm135 = vcmp.eq.s32.totalorder %v126, %v131
    %vm136 = vcmp.eq.s32.totalorder %v126, %v134
    %v137 = vsel %vm135, %v101, 0.0
    %v138 = vsel %vm136, %v102, 0.0
    %139 = vadd.xlane.f32.xlu0 %v137
    %v140 = vpop.xlane.xlu0 %139
    %141 = vadd.xlane.f32.xlu0 %v138
    %v142 = vpop.xlane.xlu0 %141
    %v143 = vsub.f32 %v123, %v140
    %v144 = vsub.f32 %v124, %v142
    %vm145 = vcmask 7168
    %146 = vst.msk [vmem:[%s4] sm:$0xff] %vm145, %v143
    %147 = vst.msk [vmem:[%s4 + $0x8] sm:$0xff] %vm145, %v144
    // Predicated region
    $region58: #{tpu_custom_call.1} parent=1 // pred_check
      _
    $region59: #{tpu_custom_call.1} parent=1 // pred_check_branch
      %149 = sbr.rel (0) target = $region61
    $region60: #{tpu_custom_call.1} parent=1 // pred_region
      %s151 = ssub.s32 256, 256
      %152 = vsyncadd [#allocation8], %s151
      %s153 = sshll.u32 [#allocation9], 4
      %s154 = int_to_ptr.vmem [resolvable:$true] %s153
      %159 = dma.vmem_to_hbm [thread:$0]  %s154, 256, %s3, [#allocation8], 128, 128, 8
    $region61: #{tpu_custom_call.1} parent=1 // pred_fallthru
      _
    // Predicated region
    $region62: #{tpu_custom_call.1} parent=1 // pred_check
      _
    $region63: #{tpu_custom_call.1} parent=1 // pred_check_branch
      %161 = sbr.rel (0) target = $region65
    $region64: #{tpu_custom_call.1} parent=1 // pred_region
      _
    $region65: #{tpu_custom_call.1} parent=1 // pred_fallthru
      _
    // Predicated region
    $region66: #{tpu_custom_call.1} parent=1 // pred_check
      _
    $region67: #{tpu_custom_call.1} parent=1 // pred_check_branch
      %163 = sbr.rel (0) target = $region69
    $region68: #{tpu_custom_call.1} parent=1 // pred_region
      %164 = dma.done [#allocation8], 256
    $region69: #{tpu_custom_call.1} parent=1 // pred_fallthru
      _
    // Predicated region
    $region70: #{tpu_custom_call.1} parent=1 // pred_check
      _
    $region71: #{tpu_custom_call.1} parent=1 // pred_check_branch
      %166 = sbr.rel (0) target = $region73
    $region72: #{tpu_custom_call.1} parent=1 // pred_region
      _
    $region73: #{tpu_custom_call.1} parent=1 // pred_fallthru
      _
    %167 = vsyncpa [#allocation7], 1
    %168 = vsyncpa [#allocation8], 1
  %169 = vsyncmov [#allocation3]
  %s170 = vpop.sfrf %169
  %p171 = scmp.eq.s32.totalorder %s170, 0
  %p172 = pneg %p171
  %174 = shalt.err (%p172)

</llo_original>
